<compile_context>
chip_gen: v7x
topology: tpu7x:2x2x1
jax: 0.10.0
libtpu: 0.0.40
codegen_flags: <defaults>
</compile_context>

<pallas_src>
import jax
import jax.numpy as jnp
from jax.experimental import pallas as pl
from jax.experimental.pallas import tpu as pltpu


def _an_kernel(x_ref, w_ref, b_ref, o_ref):
    # x_ref: [P, TILE_B] (features x batch, batch on lanes), f32
    # w_ref: [4, P, P] packed padded weights (PyTorch [out, in] layout per layer)
    # b_ref: [P, 4]    packed padded biases (column i = bias of layer i)
    # o_ref: [P, TILE_B] padded output (rows >= nAOP are zero)
    h = x_ref[...]  # already f32; no redundant cast

    h = jnp.maximum(
        jnp.dot(w_ref[0], h, preferred_element_type=jnp.float32) + b_ref[:, 0:1], 0.0)
    h = jnp.maximum(
        jnp.dot(w_ref[1], h, preferred_element_type=jnp.float32) + b_ref[:, 1:2], 0.0)
    h = jnp.maximum(
        jnp.dot(w_ref[2], h, preferred_element_type=jnp.float32) + b_ref[:, 2:3], 0.0)
    h = jnp.dot(w_ref[3], h, preferred_element_type=jnp.float32) + b_ref[:, 3:4]

    o_ref[...] = h


def an_forward(x, params, *, tile_b=128):
    """Pallas forward of AN.

    x: [B, nAIP] float32.
    params: list of 4 (W, b) pairs in PyTorch nn.Linear layout, W: [out, in], b: [out].
    Returns: [B, nAOP] float32.
    """
    B, nAIP = x.shape
    L = len(params)
    assert L == 4
    nAOP = params[-1][0].shape[0]

    # Pad all feature dims to one common multiple-of-8 width P.
    dims = [nAIP] + [w.shape[0] for w, _ in params]
    P = max(8, -(-max(dims) // 8) * 8)

    # Pack zero-padded weights into [L, P, P] and biases into [P, L].
    w_pack = jnp.zeros((L, P, P), jnp.float32)
    b_pack = jnp.zeros((P, L), jnp.float32)
    for i, (w, b) in enumerate(params):
        o, n = w.shape
        w_pack = w_pack.at[i, :o, :n].set(w.astype(jnp.float32))
        b_pack = b_pack.at[:o, i].set(b.astype(jnp.float32))

    # Transpose x so batch is the (lane) last dim; zero-pad features to P and
    # batch to a multiple of tile_b.
    Bp = -(-B // tile_b) * tile_b
    xT = jnp.zeros((P, Bp), jnp.float32).at[:nAIP, :B].set(x.T.astype(jnp.float32))

    out_padded = pl.pallas_call(
        _an_kernel,
        out_shape=jax.ShapeDtypeStruct((P, Bp), jnp.float32),
        grid=(Bp // tile_b,),
        in_specs=[
            pl.BlockSpec((P, tile_b), lambda i: (0, i)),    # activations: batch-tiled
            pl.BlockSpec((L, P, P), lambda i: (0, 0, 0)),   # weights: resident in VMEM
            pl.BlockSpec((P, L), lambda i: (0, 0)),         # biases: resident in VMEM
        ],
        out_specs=pl.BlockSpec((P, tile_b), lambda i: (0, i)),
        compiler_params=pltpu.CompilerParams(
            dimension_semantics=("parallel",)),             # megacore sharding on v7x
    )(xT, w_pack, b_pack)

    # Strip feature padding and batch padding, back to [B, nAOP].
    return out_padded[:nAOP, :B].T


def init_params(key, nAIP, nAOP):
    """PyTorch nn.Linear default init: W,b ~ U(-1/sqrt(fan_in), +1/sqrt(fan_in)).

    W stored in PyTorch layout [out_features, in_features], b: [out_features].
    """
    sizes = [(nAIP, 8), (8, 16), (16, 16), (16, nAOP)]
    params = []
    for fan_in, fan_out in sizes:
        key, kw, kb = jax.random.split(key, 3)
        bound = 1.0 / jnp.sqrt(jnp.float32(fan_in))
        w = jax.random.uniform(kw, (fan_out, fan_in), jnp.float32, -bound, bound)
        b = jax.random.uniform(kb, (fan_out,), jnp.float32, -bound, bound)
        params.append((w, b))
    return params


def an_reference(x, params):
    h = x
    for i, (w, b) in enumerate(params):
        h = h @ w.T + b
        if i < len(params) - 1:
            h = jnp.maximum(h, 0.0)
    return h


if __name__ == "__main__":
    nAIP, nAOP, batch = 4, 2, 256  # batch is a multiple of 128 -> lane-dense tiles
    key = jax.random.PRNGKey(0)
    key, kx = jax.random.split(key)
    x = jax.random.normal(kx, (batch, nAIP), jnp.float32)

    params = init_params(key, nAIP, nAOP)

    out = an_forward(x, params)
    jax.block_until_ready(out)

    ref = an_reference(x, params)
    assert out.shape == (batch, nAOP)
    assert jnp.allclose(out, ref, atol=1e-5, rtol=1e-5)

    print("KERNEL_OK")
</pallas_src>

<mosaic_0001>
module attributes {stable_mosaic.version = 11 : i64} {
  func.func @_an_kernel(%arg0: i32, %arg1: memref<16x128xf32, #tpu.memory_space<vmem>>, %arg2: memref<4x16x16xf32, #tpu.memory_space<vmem>>, %arg3: memref<16x4xf32, #tpu.memory_space<vmem>>, %arg4: memref<16x128xf32, #tpu.memory_space<vmem>>) attributes {dimension_semantics = [#tpu.dimension_semantics<parallel>], iteration_bounds = array<i64: 2>, scalar_prefetch = 0 : i64, scratch_operands = 0 : i64, tpu.core_type = #tpu.core_type<tc>, window_params = [{transform_indices = @transform_0, window_bounds = array<i64: 16, 128>}, {pipeline_mode = #tpu.pipeline_mode<synchronous>, transform_indices = @transform_1, window_bounds = array<i64: 4, 16, 16>}, {pipeline_mode = #tpu.pipeline_mode<synchronous>, transform_indices = @transform_2, window_bounds = array<i64: 16, 4>}, {transform_indices = @transform_3, window_bounds = array<i64: 16, 128>}]} {
    %c0 = arith.constant 0 : index
    %c0_0 = arith.constant 0 : index
    %0 = vector.load %arg1[%c0, %c0_0] : memref<16x128xf32, #tpu.memory_space<vmem>>, vector<16x128xf32>
    %c0_1 = arith.constant 0 : index
    %c0_2 = arith.constant 0 : index
    %c0_3 = arith.constant 0 : index
    %1 = vector.load %arg2[%c0_1, %c0_2, %c0_3] : memref<4x16x16xf32, #tpu.memory_space<vmem>>, vector<1x16x16xf32>
    %2 = vector.shape_cast %1 : vector<1x16x16xf32> to vector<16x16xf32>
    %cst = arith.constant dense<0.000000e+00> : vector<16x128xf32>
    %3 = tpu.matmul %2, %0, %cst {dimension_numbers = #tpu.dot_dimension_numbers<[1], [0], [0], [1], [0, 0, 1, 1], [], []>} : vector<16x16xf32>, vector<16x128xf32>, vector<16x128xf32> -> vector<16x128xf32>
    %c0_4 = arith.constant 0 : index
    %c0_5 = arith.constant 0 : index
    %4 = vector.load %arg3[%c0_4, %c0_5] : memref<16x4xf32, #tpu.memory_space<vmem>>, vector<16x1xf32>
    %5 = vector.broadcast %4 : vector<16x1xf32> to vector<16x128xf32>
    %6 = arith.addf %3, %5 : vector<16x128xf32>
    %cst_6 = arith.constant 0.000000e+00 : f32
    %7 = vector.broadcast %cst_6 : f32 to vector<16x128xf32>
    %8 = arith.maximumf %6, %7 : vector<16x128xf32>
    %c1 = arith.constant 1 : index
    %c0_7 = arith.constant 0 : index
    %c0_8 = arith.constant 0 : index
    %9 = vector.load %arg2[%c1, %c0_7, %c0_8] : memref<4x16x16xf32, #tpu.memory_space<vmem>>, vector<1x16x16xf32>
    %10 = vector.shape_cast %9 : vector<1x16x16xf32> to vector<16x16xf32>
    %cst_9 = arith.constant dense<0.000000e+00> : vector<16x128xf32>
    %11 = tpu.matmul %10, %8, %cst_9 {dimension_numbers = #tpu.dot_dimension_numbers<[1], [0], [0], [1], [0, 0, 1, 1], [], []>} : vector<16x16xf32>, vector<16x128xf32>, vector<16x128xf32> -> vector<16x128xf32>
    %c0_10 = arith.constant 0 : index
    %c1_11 = arith.constant 1 : index
    %12 = vector.load %arg3[%c0_10, %c1_11] : memref<16x4xf32, #tpu.memory_space<vmem>>, vector<16x1xf32>
    %13 = vector.broadcast %12 : vector<16x1xf32> to vector<16x128xf32>
    %14 = arith.addf %11, %13 : vector<16x128xf32>
    %cst_12 = arith.constant 0.000000e+00 : f32
    %15 = vector.broadcast %cst_12 : f32 to vector<16x128xf32>
    %16 = arith.maximumf %14, %15 : vector<16x128xf32>
    %c2 = arith.constant 2 : index
    %c0_13 = arith.constant 0 : index
    %c0_14 = arith.constant 0 : index
    %17 = vector.load %arg2[%c2, %c0_13, %c0_14] : memref<4x16x16xf32, #tpu.memory_space<vmem>>, vector<1x16x16xf32>
    %18 = vector.shape_cast %17 : vector<1x16x16xf32> to vector<16x16xf32>
    %cst_15 = arith.constant dense<0.000000e+00> : vector<16x128xf32>
    %19 = tpu.matmul %18, %16, %cst_15 {dimension_numbers = #tpu.dot_dimension_numbers<[1], [0], [0], [1], [0, 0, 1, 1], [], []>} : vector<16x16xf32>, vector<16x128xf32>, vector<16x128xf32> -> vector<16x128xf32>
    %c0_16 = arith.constant 0 : index
    %c2_17 = arith.constant 2 : index
    %20 = vector.load %arg3[%c0_16, %c2_17] : memref<16x4xf32, #tpu.memory_space<vmem>>, vector<16x1xf32>
    %21 = vector.broadcast %20 : vector<16x1xf32> to vector<16x128xf32>
    %22 = arith.addf %19, %21 : vector<16x128xf32>
    %cst_18 = arith.constant 0.000000e+00 : f32
    %23 = vector.broadcast %cst_18 : f32 to vector<16x128xf32>
    %24 = arith.maximumf %22, %23 : vector<16x128xf32>
    %c3 = arith.constant 3 : index
    %c0_19 = arith.constant 0 : index
    %c0_20 = arith.constant 0 : index
    %25 = vector.load %arg2[%c3, %c0_19, %c0_20] : memref<4x16x16xf32, #tpu.memory_space<vmem>>, vector<1x16x16xf32>
    %26 = vector.shape_cast %25 : vector<1x16x16xf32> to vector<16x16xf32>
    %cst_21 = arith.constant dense<0.000000e+00> : vector<16x128xf32>
    %27 = tpu.matmul %26, %24, %cst_21 {dimension_numbers = #tpu.dot_dimension_numbers<[1], [0], [0], [1], [0, 0, 1, 1], [], []>} : vector<16x16xf32>, vector<16x128xf32>, vector<16x128xf32> -> vector<16x128xf32>
    %c0_22 = arith.constant 0 : index
    %c3_23 = arith.constant 3 : index
    %28 = vector.load %arg3[%c0_22, %c3_23] : memref<16x4xf32, #tpu.memory_space<vmem>>, vector<16x1xf32>
    %29 = vector.broadcast %28 : vector<16x1xf32> to vector<16x128xf32>
    %30 = arith.addf %27, %29 : vector<16x128xf32>
    %c0_24 = arith.constant 0 : index
    %c0_25 = arith.constant 0 : index
    %31 = vector.load %arg4[%c0_24, %c0_25] : memref<16x128xf32, #tpu.memory_space<vmem>>, vector<16x128xf32>
    tpu.vector_store %arg4[%c0_24, %c0_25], %30 {strides = array<i32>} : memref<16x128xf32, #tpu.memory_space<vmem>>, vector<16x128xf32>,
    return
  }
  func.func @transform_0(%arg0: i32) -> (i32, i32) {
    %c0_i32 = arith.constant 0 : i32
    %c0_i32_0 = arith.constant 0 : i32
    return %c0_i32, %arg0 : i32, i32
  }
  func.func @transform_1(%arg0: i32) -> (i32, i32, i32) {
    %c0_i32 = arith.constant 0 : i32
    %c0_i32_0 = arith.constant 0 : i32
    %c0_i32_1 = arith.constant 0 : i32
    %c0_i32_2 = arith.constant 0 : i32
    return %c0_i32, %c0_i32_0, %c0_i32_1 : i32, i32, i32
  }
  func.func @transform_2(%arg0: i32) -> (i32, i32) {
    %c0_i32 = arith.constant 0 : i32
    %c0_i32_0 = arith.constant 0 : i32
    %c0_i32_1 = arith.constant 0 : i32
    return %c0_i32, %c0_i32_0 : i32, i32
  }
  func.func @transform_3(%arg0: i32) -> (i32, i32) {
    %c0_i32 = arith.constant 0 : i32
    %c0_i32_0 = arith.constant 0 : i32
    return %c0_i32, %arg0 : i32, i32
  }
}

</mosaic_0001>

<llo_original>
// kernel: tpu_custom_call.1
$region0: #{tpu_custom_call.1}
  #allocation0 [shape = 'u32[]', space=smem, size = 0x4, offset = 0x4, fixed_abs, tag = 'smem constant byte address 0x4 - core index']
  #allocation1 [shape = 'u32[144,128]{1,0:T(1,128)}', space=vmem, size = 0x12000, scoped, tag = 'internal scratch']
  %s0 = inlined_call_operand.hbm [shape: f32[16,256], index: 0, kind: input, shape index: {}]
  %s1 = inlined_call_operand.hbm [shape: f32[4,16,16], index: 1, kind: input, shape index: {}]
  %s2 = inlined_call_operand.vmem [shape: f32[16,4], index: 2, kind: input, shape index: {}]
  %s3 = inlined_call_operand.hbm [shape: f32[16,256], index: 3, kind: output, shape index: {}]
  %s4 = sld [smem:[#allocation0]]
  $region53: #{tpu_custom_call.1} parent=0
    _
  %s6 = ssub.s32 1, %s4
  %s7 = scalar_select 0, %s6, %s4
  $region1: #{tpu_custom_call.1} parent=0
    #allocation2 [shape = 'u8[16384]{0}', space=vmem, size = 0x4000, scoped, tag = 'input window, operand 0']
    #allocation3 [shape = 's32[2]{0}', space=sflag, size = 0x8, scoped, tag = 'scoped memory for tpu_custom_call.1']
    #allocation4 [shape = 's32[2]{0}', space=sflag, size = 0x8, scoped, tag = 'scoped memory for tpu_custom_call.1']
    #allocation5 [shape = 'u8[32768]{0}', space=vmem, size = 0x8000, scoped, tag = 'input window, operand 1, single buffered']
    #allocation6 [shape = 's32[1]{0}', space=sflag, size = 0x4, scoped, tag = 'scoped memory for tpu_custom_call.1']
    #allocation7 [shape = 'u8[16384]{0}', space=vmem, size = 0x4000, scoped, tag = 'output window, operand 0']
    %8 = vsyncpa [#allocation3], 0
    %s9 = scalar_lea.sflag [#allocation3], 1
    %10 = vsyncpa %s9, 0
    %11 = vsyncpa [#allocation6], 0
    %12 = vsyncpa [#allocation4], 0
    %s13 = scalar_lea.sflag [#allocation4], 1
    %14 = vsyncpa %s13, 0
    loop: start=0, step=1, limit=4
    $region2: #{tpu_custom_call.1} parent=1 // loop_pre_header
      _
    $region3: #{tpu_custom_call.1} parent=1 // loop_header
      %s16 = sphi 0, %s20
      %p17 = scmp.ge.s32.totalorder %s16, 4
      %s26 = sphi 0, %s28
      %s29 = sphi 0, %s26
      %s30 = sphi 0, %s29
      %s46 = sphi 0, %s30
      %s50 = sphi 0, %s50
      %s52 = sphi 0, %s50
      %s53 = sphi 0, %s52
      %s67 = sphi 0, %s53
      %s71 = sphi 0, %s71
      %s73 = sphi 0, %s71
      %s74 = sphi 0, %s73
      %s88 = sphi 0, %s74
      %s94 = sphi 0, %s96
      %s97 = sphi 0, %s94
      %s98 = sphi 0, %s97
      %s114 = sphi 0, %s98
    $region4: #{tpu_custom_call.1} parent=1 // loop_header_branch
      %19 = sbr.rel (%p17) target = $region8
    $region5: #{tpu_custom_call.1} parent=1 // loop_body
      %s21 = ssub.s32 %s16, 1
      %s22 = ssub.s32 %s16, 2
      %s23 = sadd.s32 %s16, 1
      %s24 = ssub.s32 %s16, %s23
      %p25 = scmp.eq.s32.totalorder %s24, 0
      %s27 = sadd.s32 %s26, 1
      %s28 = scalar_select %p25, %s26, %s27
      %p31 = pneg %p25
      %p32 = scmp.eq.s32.totalorder %s16, 1
      %p33 = por %p31, %p32
      %p34 = scmp.ne.s32.totalorder %s26, %s29
      %p35 = scmp.eq.s32.totalorder %s16, 0
      %p36 = por %p34, %p35
      %p37 = scmp.ne.s32.totalorder %s26, %s29
      %p38 = scmp.eq.s32.totalorder %s21, 1
      %p39 = por %p37, %p38
      %p40 = scmp.ne.s32.totalorder %s29, %s30
      %p41 = scmp.eq.s32.totalorder %s21, 0
      %p42 = por %p40, %p41
      %p43 = scmp.ne.s32.totalorder %s29, %s30
      %p44 = scmp.eq.s32.totalorder %s22, 1
      %p45 = por %p43, %p44
      %p47 = scmp.ne.s32.totalorder %s30, %s46
      %p48 = scmp.eq.s32.totalorder %s22, 0
      %p49 = por %p47, %p48
      %s51 = sadd.s32 %s50, 1
      %p54 = scmp.eq.s32.totalorder %s16, 1
      %p55 = scmp.ne.s32.totalorder %s50, %s52
      %p56 = scmp.eq.s32.totalorder %s16, 0
      %p57 = por %p55, %p56
      %p58 = scmp.ne.s32.totalorder %s50, %s52
      %p59 = scmp.eq.s32.totalorder %s21, 1
      %p60 = por %p58, %p59
      %p61 = scmp.ne.s32.totalorder %s52, %s53
      %p62 = scmp.eq.s32.totalorder %s21, 0
      %p63 = por %p61, %p62
      %p64 = scmp.ne.s32.totalorder %s52, %s53
      %p65 = scmp.eq.s32.totalorder %s22, 1
      %p66 = por %p64, %p65
      %p68 = scmp.ne.s32.totalorder %s53, %s67
      %p69 = scmp.eq.s32.totalorder %s22, 0
      %p70 = por %p68, %p69
      %s72 = sadd.s32 %s71, 1
      %p75 = scmp.eq.s32.totalorder %s16, 1
      %p76 = scmp.ne.s32.totalorder %s71, %s73
      %p77 = scmp.eq.s32.totalorder %s16, 0
      %p78 = por %p76, %p77
      %p79 = scmp.ne.s32.totalorder %s71, %s73
      %p80 = scmp.eq.s32.totalorder %s21, 1
      %p81 = por %p79, %p80
      %p82 = scmp.ne.s32.totalorder %s73, %s74
      %p83 = scmp.eq.s32.totalorder %s21, 0
      %p84 = por %p82, %p83
      %p85 = scmp.ne.s32.totalorder %s73, %s74
      %p86 = scmp.eq.s32.totalorder %s22, 1
      %p87 = por %p85, %p86
      %p89 = scmp.ne.s32.totalorder %s74, %s88
      %p90 = scmp.eq.s32.totalorder %s22, 0
      %p91 = por %p89, %p90
      %s92 = ssub.s32 %s16, %s23
      %p93 = scmp.eq.s32.totalorder %s92, 0
      %s95 = sadd.s32 %s94, 1
      %s96 = scalar_select %p93, %s94, %s95
      %p99 = pneg %p93
      %p100 = scmp.eq.s32.totalorder %s16, 1
      %p101 = por %p99, %p100
      %p102 = scmp.ne.s32.totalorder %s94, %s97
      %p103 = scmp.eq.s32.totalorder %s16, 0
      %p104 = por %p102, %p103
      %p105 = scmp.ne.s32.totalorder %s94, %s97
      %p106 = scmp.eq.s32.totalorder %s21, 1
      %p107 = por %p105, %p106
      %p108 = scmp.ne.s32.totalorder %s97, %s98
      %p109 = scmp.eq.s32.totalorder %s21, 0
      %p110 = por %p108, %p109
      %p111 = scmp.ne.s32.totalorder %s97, %s98
      %p112 = scmp.eq.s32.totalorder %s22, 1
      %p113 = por %p111, %p112
      %p115 = scmp.ne.s32.totalorder %s98, %s114
      %p116 = scmp.eq.s32.totalorder %s22, 0
      %p117 = por %p115, %p116
      %p118 = scmp.le.s32.totalorder 1, %s16
      %p119 = scmp.lt.s32.totalorder %s16, 3
      %p120 = pnand %p118, %p119
      %p121 = pneg %p120
      // Predicated region
      $region9: #{tpu_custom_call.1} parent=5 // pred_check
        _
      $region10: #{tpu_custom_call.1} parent=5 // pred_check_branch
        %123 = sbr.rel (%p120) target = $region12
      $region11: #{tpu_custom_call.1} parent=5 // pred_region
        %s124 = ssub.s32 %s16, 1
        // Predicated region
        $region13: #{tpu_custom_call.1} parent=11 // pred_check
          %p125 = pneg %p63
        $region14: #{tpu_custom_call.1} parent=11 // pred_check_branch
          %127 = sbr.rel (%p125) target = $region16
        $region15: #{tpu_custom_call.1} parent=11 // pred_region
          %s129 = ssub.s32 1024, 1024
          %130 = vsyncadd [#allocation6], %s129
          %s131 = sshll.u32 [#allocation5], 4
          %s132 = int_to_ptr.vmem [resolvable:$true] %s131
          %137 = dma.hbm_to_vmem [thread:$0]  %s1, 1024, %s132, [#allocation6], 128, 128, 8
        $region16: #{tpu_custom_call.1} parent=11 // pred_fallthru
          _
        // Predicated region
        $region17: #{tpu_custom_call.1} parent=11 // pred_check
          %p138 = pneg %p84
        $region18: #{tpu_custom_call.1} parent=11 // pred_check_branch
          %140 = sbr.rel (%p138) target = $region20
        $region19: #{tpu_custom_call.1} parent=11 // pred_region
          _
        $region20: #{tpu_custom_call.1} parent=11 // pred_fallthru
          _
      $region12: #{tpu_custom_call.1} parent=5 // pred_fallthru
        _
      %p141 = scmp.lt.s32.totalorder %s16, 2
      // Predicated region
      $region21: #{tpu_custom_call.1} parent=5 // pred_check
        %p142 = pneg %p141
      $region22: #{tpu_custom_call.1} parent=5 // pred_check_branch
        %144 = sbr.rel (%p142) target = $region24
      $region23: #{tpu_custom_call.1} parent=5 // pred_region
        // Predicated region
        $region25: #{tpu_custom_call.1} parent=23 // pred_check
          %p145 = pneg %p36
        $region26: #{tpu_custom_call.1} parent=23 // pred_check_branch
          %147 = sbr.rel (%p145) target = $region28
        $region27: #{tpu_custom_call.1} parent=23 // pred_region
          %s148 = sand.u32 %s26, 1
          %s149 = scalar_lea.sflag [#allocation3], %s148
          %s150 = sand.u32 %s26, 1
          %s151 = smul.addr %s150, 16
          %s152 = scalar_lea.vmem [#allocation2], %s151
          %s154 = ssub.s32 256, 256
          %155 = vsyncadd %s149, %s154
          %s156 = smul.addr %s16, 128
          %s157 = scalar_lea.hbm %s0, %s156
          %s158 = sshll.u32 %s152, 4
          %s159 = int_to_ptr.vmem [resolvable:$true] %s158
          %164 = dma.hbm_to_vmem [thread:$0]  %s157, 256, %s159, %s149, 256, 128, 8
        $region28: #{tpu_custom_call.1} parent=23 // pred_fallthru
          _
      $region24: #{tpu_custom_call.1} parent=5 // pred_fallthru
        _
      %p165 = scmp.le.s32.totalorder 1, %s16
      %p166 = scmp.lt.s32.totalorder %s16, 3
      %p167 = pnand %p165, %p166
      %p168 = pneg %p167
      // Predicated region
      $region29: #{tpu_custom_call.1} parent=5 // pred_check
        _
      $region30: #{tpu_custom_call.1} parent=5 // pred_check_branch
        %170 = sbr.rel (%p167) target = $region32
      $region31: #{tpu_custom_call.1} parent=5 // pred_region
        %s171 = ssub.s32 %s16, 1
        %s172 = sand.u32 %s29, 1
        %s173 = scalar_lea.sflag [#allocation3], %s172
        %s174 = sand.u32 %s29, 1
        %s175 = smul.addr %s174, 16
        %s176 = scalar_lea.vmem [#allocation2], %s175
        // Predicated region
        $region33: #{tpu_custom_call.1} parent=31 // pred_check
          %p177 = pneg %p42
        $region34: #{tpu_custom_call.1} parent=31 // pred_check_branch
          %179 = sbr.rel (%p177) target = $region36
        $region35: #{tpu_custom_call.1} parent=31 // pred_region
          %180 = dma.done %s173, 256
        $region36: #{tpu_custom_call.1} parent=31 // pred_fallthru
          _
        // Predicated region
        $region37: #{tpu_custom_call.1} parent=31 // pred_check
          %p181 = pneg %p63
        $region38: #{tpu_custom_call.1} parent=31 // pred_check_branch
          %183 = sbr.rel (%p181) target = $region40
        $region39: #{tpu_custom_call.1} parent=31 // pred_region
          %184 = dma.done [#allocation6], 1024
        $region40: #{tpu_custom_call.1} parent=31 // pred_fallthru
          _
        %s185 = sand.u32 %s29, 1
        %s186 = scalar_lea.sflag [#allocation3], %s185
        %s187 = sand.u32 %s29, 1
        %s188 = smul.addr %s187, 16
        %s189 = scalar_lea.vmem [#allocation2], %s188
        %p190 = pneg %p42
        %p191 = pneg %p39
        %p192 = pneg %p63
        %p193 = pneg %p60
        %p194 = pneg %p84
        %p195 = pneg %p81
        %p196 = pneg %p110
        %p197 = pneg %p107
        %s198 = sand.u32 %s97, 1
        %s199 = scalar_lea.sflag [#allocation4], %s198
        %s200 = sand.u32 %s97, 1
        %s201 = smul.addr %s200, 16
        %s202 = scalar_lea.vmem [#allocation7], %s201
        %v203 = vld [vmem:[%s176] sm:$0xff]
        %v204 = vld [vmem:[%s176 + $0x8] sm:$0xff]
        %v205 = vld [vmem:[#allocation5] sm:$0xff]
        %v206 = vld [vmem:[#allocation5 + $0x8] sm:$0xff]
        %v207 = vld [vmem:[%s2] sm:$0xff]
        %v208 = vld [vmem:[%s2 + $0x8] sm:$0xff]
        %210 = vset.pattern.permute.xlu0 0
        %211 = vperm.xlu0 %210, %v207
        %v212 = vpop.permute.xlu0 %211
        %215 = vset.pattern.permute.xlu0 0
        %216 = vperm.xlu0 %215, %v208
        %v217 = vpop.permute.xlu0 %216
        %vm219 = vcmask 130048
        %v221 = vsel %vm219, %v205, 0
        %v224 = vsel %vm219, %v206, 0
        %226 = vmatprep.subr.mxu0 0.0
        %227 = vmatpush1.msra.mxu0 %v203
        %228 = vmatprep.subr.mxu0 0.0
        %229 = vmatpush1.msra.mxu0 %v204
        %230 = vmatprep.subr.mxu0 0.0
        %231 = vmatpush1.msra.mxu0 0.0
        %232 = vmatprep.subr.mxu0 0.0
        %233 = vmatpush1.msra.mxu0 0.0
        %234 = vmatprep.subr.mxu0 0.0
        %235 = vmatpush1.msra.mxu0 0.0
        %236 = vmatprep.subr.mxu0 0.0
        %237 = vmatpush1.msra.mxu0 0.0
        %238 = vmatprep.subr.mxu0 0.0
        %239 = vmatpush1.msra.mxu0 0.0
        %240 = vmatprep.subr.mxu0 0.0
        %241 = vmatpush1.msra.mxu0 0.0
        %242 = vmatprep.subr.mxu0 0.0
        %243 = vmatpush1.msra.mxu0 0.0
        %244 = vmatprep.subr.mxu0 0.0
        %245 = vmatpush1.msra.mxu0 0.0
        %246 = vmatprep.subr.mxu0 0.0
        %247 = vmatpush1.msra.mxu0 0.0
        %248 = vmatprep.subr.mxu0 0.0
        %249 = vmatpush1.msra.mxu0 0.0
        %250 = vmatprep.subr.mxu0 0.0
        %251 = vmatpush1.msra.mxu0 0.0
        %252 = vmatprep.subr.mxu0 0.0
        %253 = vmatpush1.msra.mxu0 0.0
        %254 = vmatprep.subr.mxu0 0.0
        %255 = vmatpush1.msra.mxu0 0.0
        %256 = vmatprep.subr.mxu0 0.0
        %257 = vmatpush1.msra.mxu0 0.0
        %258 = vmatprep.subr.mxu0 0.0
        %259 = vmatpush1.msra.mxu0 0.0
        %260 = vmatprep.subr.mxu0 0.0
        %261 = vmatpush1.msra.mxu0 0.0
        %262 = vmatprep.subr.mxu0 0.0
        %263 = vmatpush1.msra.mxu0 0.0
        %264 = vmatprep.subr.mxu0 0.0
        %265 = vmatpush1.msra.mxu0 0.0
        %266 = vmatprep.subr.mxu0 0.0
        %267 = vmatpush1.msra.mxu0 0.0
        %268 = vmatprep.subr.mxu0 0.0
        %269 = vmatpush1.msra.mxu0 0.0
        %270 = vmatprep.subr.mxu0 0.0
        %271 = vmatpush1.msra.mxu0 0.0
        %272 = vmatprep.subr.mxu0 0.0
        %273 = vmatpush1.msra.mxu0 0.0
        %274 = vmatprep.subr.mxu0 0.0
        %275 = vmatpush1.msra.mxu0 0.0
        %276 = vmatprep.subr.mxu0 0.0
        %277 = vmatpush1.msra.mxu0 0.0
        %278 = vmatprep.subr.mxu0 0.0
        %279 = vmatpush1.msra.mxu0 0.0
        %280 = vmatprep.subr.mxu0 0.0
        %281 = vmatpush1.msra.mxu0 0.0
        %282 = vmatprep.subr.mxu0 0.0
        %283 = vmatpush1.msra.mxu0 0.0
        %284 = vmatprep.subr.mxu0 0.0
        %285 = vmatpush1.msra.mxu0 0.0
        %286 = vmatprep.subr.mxu0 0.0
        %287 = vmatpush1.msra.mxu0 0.0
        %288 = vmatprep.subr.mxu0 0.0
        %289 = vmatpush1.msra.mxu0 0.0
        %290 = vmatprep.mubr.f32.mxu0 0.0
        %291 = vmatmul.mubr.f32.gmra.mrb[0].mxu0 %v221
        %v292 = vpop.f32.mrb[0].mxu0
        %v293 = vadd.f32 %v212, %v292
        %v294 = vpop.f32.mrb[0].mxu0
        %295 = vmatprep.mubr.f32.mxu0 0.0
        %296 = vmatmul.mubr.f32.gmra.mrb[0].mxu0 %v224
        %v297 = vpop.f32.mrb[0].mxu0
        %v298 = vadd.f32 %v217, %v297
        %v299 = vpop.f32.mrb[0].mxu0
        %300 = vdwg.mxu0
        %v301 = vmax.f32 %v293, 0.0
        %v302 = vmax.f32 %v298, 0.0
        %s303 = scalar_lea.vmem [#allocation5], 16
        %v304 = vld [vmem:[%s303] sm:$0xff]
        %v305 = vld [vmem:[%s303 + $0x8] sm:$0xff]
        %306 = vset.pattern.permute.xlu0 1
        %307 = vperm.xlu0 %306, %v207
        %v308 = vpop.permute.xlu0 %307
        %310 = vset.pattern.permute.xlu0 1
        %311 = vperm.xlu0 %310, %v208
        %v312 = vpop.permute.xlu0 %311
        %v315 = vsel %vm219, %v304, 0
        %v318 = vsel %vm219, %v305, 0
        %320 = vmatprep.subr.mxu0 0.0
        %321 = vmatpush1.msra.mxu0 %v301
        %322 = vmatprep.subr.mxu0 0.0
        %323 = vmatpush1.msra.mxu0 %v302
        %324 = vmatprep.subr.mxu0 0.0
        %325 = vmatpush1.msra.mxu0 0.0
        %326 = vmatprep.subr.mxu0 0.0
        %327 = vmatpush1.msra.mxu0 0.0
        %328 = vmatprep.subr.mxu0 0.0
        %329 = vmatpush1.msra.mxu0 0.0
        %330 = vmatprep.subr.mxu0 0.0
        %331 = vmatpush1.msra.mxu0 0.0
        %332 = vmatprep.subr.mxu0 0.0
        %333 = vmatpush1.msra.mxu0 0.0
        %334 = vmatprep.subr.mxu0 0.0
        %335 = vmatpush1.msra.mxu0 0.0
        %336 = vmatprep.subr.mxu0 0.0
        %337 = vmatpush1.msra.mxu0 0.0
        %338 = vmatprep.subr.mxu0 0.0
        %339 = vmatpush1.msra.mxu0 0.0
        %340 = vmatprep.subr.mxu0 0.0
        %341 = vmatpush1.msra.mxu0 0.0
        %342 = vmatprep.subr.mxu0 0.0
        %343 = vmatpush1.msra.mxu0 0.0
        %344 = vmatprep.subr.mxu0 0.0
        %345 = vmatpush1.msra.mxu0 0.0
        %346 = vmatprep.subr.mxu0 0.0
        %347 = vmatpush1.msra.mxu0 0.0
        %348 = vmatprep.subr.mxu0 0.0
        %349 = vmatpush1.msra.mxu0 0.0
        %350 = vmatprep.subr.mxu0 0.0
        %351 = vmatpush1.msra.mxu0 0.0
        %352 = vmatprep.subr.mxu0 0.0
        %353 = vmatpush1.msra.mxu0 0.0
        %354 = vmatprep.subr.mxu0 0.0
        %355 = vmatpush1.msra.mxu0 0.0
        %356 = vmatprep.subr.mxu0 0.0
        %357 = vmatpush1.msra.mxu0 0.0
        %358 = vmatprep.subr.mxu0 0.0
        %359 = vmatpush1.msra.mxu0 0.0
        %360 = vmatprep.subr.mxu0 0.0
        %361 = vmatpush1.msra.mxu0 0.0
        %362 = vmatprep.subr.mxu0 0.0
        %363 = vmatpush1.msra.mxu0 0.0
        %364 = vmatprep.subr.mxu0 0.0
        %365 = vmatpush1.msra.mxu0 0.0
        %366 = vmatprep.subr.mxu0 0.0
        %367 = vmatpush1.msra.mxu0 0.0
        %368 = vmatprep.subr.mxu0 0.0
        %369 = vmatpush1.msra.mxu0 0.0
        %370 = vmatprep.subr.mxu0 0.0
        %371 = vmatpush1.msra.mxu0 0.0
        %372 = vmatprep.subr.mxu0 0.0
        %373 = vmatpush1.msra.mxu0 0.0
        %374 = vmatprep.subr.mxu0 0.0
        %375 = vmatpush1.msra.mxu0 0.0
        %376 = vmatprep.subr.mxu0 0.0
        %377 = vmatpush1.msra.mxu0 0.0
        %378 = vmatprep.subr.mxu0 0.0
        %379 = vmatpush1.msra.mxu0 0.0
        %380 = vmatprep.subr.mxu0 0.0
        %381 = vmatpush1.msra.mxu0 0.0
        %382 = vmatprep.subr.mxu0 0.0
        %383 = vmatpush1.msra.mxu0 0.0
        %384 = vmatprep.mubr.f32.mxu0 0.0
        %385 = vmatmul.mubr.f32.gmra.mrb[0].mxu0 %v315
        %v386 = vpop.f32.mrb[0].mxu0
        %v387 = vadd.f32 %v308, %v386
        %v388 = vpop.f32.mrb[0].mxu0
        %389 = vmatprep.mubr.f32.mxu0 0.0
        %390 = vmatmul.mubr.f32.gmra.mrb[0].mxu0 %v318
        %v391 = vpop.f32.mrb[0].mxu0
        %v392 = vadd.f32 %v312, %v391
        %v393 = vpop.f32.mrb[0].mxu0
        %394 = vdwg.mxu0
        %v395 = vmax.f32 %v387, 0.0
        %v396 = vmax.f32 %v392, 0.0
        %s397 = scalar_lea.vmem [#allocation5], 32
        %v398 = vld [vmem:[%s397] sm:$0xff]
        %v399 = vld [vmem:[%s397 + $0x8] sm:$0xff]
        %400 = vset.pattern.permute.xlu0 2
        %401 = vperm.xlu0 %400, %v207
        %v402 = vpop.permute.xlu0 %401
        %404 = vset.pattern.permute.xlu0 2
        %405 = vperm.xlu0 %404, %v208
        %v406 = vpop.permute.xlu0 %405
        %v409 = vsel %vm219, %v398, 0
        %v412 = vsel %vm219, %v399, 0
        %414 = vmatprep.subr.mxu0 0.0
        %415 = vmatpush1.msra.mxu0 %v395
        %416 = vmatprep.subr.mxu0 0.0
        %417 = vmatpush1.msra.mxu0 %v396
        %418 = vmatprep.subr.mxu0 0.0
        %419 = vmatpush1.msra.mxu0 0.0
        %420 = vmatprep.subr.mxu0 0.0
        %421 = vmatpush1.msra.mxu0 0.0
        %422 = vmatprep.subr.mxu0 0.0
        %423 = vmatpush1.msra.mxu0 0.0
        %424 = vmatprep.subr.mxu0 0.0
        %425 = vmatpush1.msra.mxu0 0.0
        %426 = vmatprep.subr.mxu0 0.0
        %427 = vmatpush1.msra.mxu0 0.0
        %428 = vmatprep.subr.mxu0 0.0
        %429 = vmatpush1.msra.mxu0 0.0
        %430 = vmatprep.subr.mxu0 0.0
        %431 = vmatpush1.msra.mxu0 0.0
        %432 = vmatprep.subr.mxu0 0.0
        %433 = vmatpush1.msra.mxu0 0.0
        %434 = vmatprep.subr.mxu0 0.0
        %435 = vmatpush1.msra.mxu0 0.0
        %436 = vmatprep.subr.mxu0 0.0
        %437 = vmatpush1.msra.mxu0 0.0
        %438 = vmatprep.subr.mxu0 0.0
        %439 = vmatpush1.msra.mxu0 0.0
        %440 = vmatprep.subr.mxu0 0.0
        %441 = vmatpush1.msra.mxu0 0.0
        %442 = vmatprep.subr.mxu0 0.0
        %443 = vmatpush1.msra.mxu0 0.0
        %444 = vmatprep.subr.mxu0 0.0
        %445 = vmatpush1.msra.mxu0 0.0
        %446 = vmatprep.subr.mxu0 0.0
        %447 = vmatpush1.msra.mxu0 0.0
        %448 = vmatprep.subr.mxu0 0.0
        %449 = vmatpush1.msra.mxu0 0.0
        %450 = vmatprep.subr.mxu0 0.0
        %451 = vmatpush1.msra.mxu0 0.0
        %452 = vmatprep.subr.mxu0 0.0
        %453 = vmatpush1.msra.mxu0 0.0
        %454 = vmatprep.subr.mxu0 0.0
        %455 = vmatpush1.msra.mxu0 0.0
        %456 = vmatprep.subr.mxu0 0.0
        %457 = vmatpush1.msra.mxu0 0.0
        %458 = vmatprep.subr.mxu0 0.0
        %459 = vmatpush1.msra.mxu0 0.0
        %460 = vmatprep.subr.mxu0 0.0
        %461 = vmatpush1.msra.mxu0 0.0
        %462 = vmatprep.subr.mxu0 0.0
        %463 = vmatpush1.msra.mxu0 0.0
        %464 = vmatprep.subr.mxu0 0.0
        %465 = vmatpush1.msra.mxu0 0.0
        %466 = vmatprep.subr.mxu0 0.0
        %467 = vmatpush1.msra.mxu0 0.0
        %468 = vmatprep.subr.mxu0 0.0
        %469 = vmatpush1.msra.mxu0 0.0
        %470 = vmatprep.subr.mxu0 0.0
        %471 = vmatpush1.msra.mxu0 0.0
        %472 = vmatprep.subr.mxu0 0.0
        %473 = vmatpush1.msra.mxu0 0.0
        %474 = vmatprep.subr.mxu0 0.0
        %475 = vmatpush1.msra.mxu0 0.0
        %476 = vmatprep.subr.mxu0 0.0
        %477 = vmatpush1.msra.mxu0 0.0
        %478 = vmatprep.mubr.f32.mxu0 0.0
        %479 = vmatmul.mubr.f32.gmra.mrb[0].mxu0 %v409
        %v480 = vpop.f32.mrb[0].mxu0
        %v481 = vadd.f32 %v402, %v480
        %v482 = vpop.f32.mrb[0].mxu0
        %483 = vmatprep.mubr.f32.mxu0 0.0
        %484 = vmatmul.mubr.f32.gmra.mrb[0].mxu0 %v412
        %v485 = vpop.f32.mrb[0].mxu0
        %v486 = vadd.f32 %v406, %v485
        %v487 = vpop.f32.mrb[0].mxu0
        %488 = vdwg.mxu0
        %v489 = vmax.f32 %v481, 0.0
        %v490 = vmax.f32 %v486, 0.0
        %s491 = scalar_lea.vmem [#allocation5], 48
        %v492 = vld [vmem:[%s491] sm:$0xff]
        %v493 = vld [vmem:[%s491 + $0x8] sm:$0xff]
        %494 = vset.pattern.permute.xlu0 3
        %495 = vperm.xlu0 %494, %v207
        %v496 = vpop.permute.xlu0 %495
        %498 = vset.pattern.permute.xlu0 3
        %499 = vperm.xlu0 %498, %v208
        %v500 = vpop.permute.xlu0 %499
        %v503 = vsel %vm219, %v492, 0
        %v506 = vsel %vm219, %v493, 0
        %508 = vmatprep.subr.mxu0 0.0
        %509 = vmatpush1.msra.mxu0 %v489
        %510 = vmatprep.subr.mxu0 0.0
        %511 = vmatpush1.msra.mxu0 %v490
        %512 = vmatprep.subr.mxu0 0.0
        %513 = vmatpush1.msra.mxu0 0.0
        %514 = vmatprep.subr.mxu0 0.0
        %515 = vmatpush1.msra.mxu0 0.0
        %516 = vmatprep.subr.mxu0 0.0
        %517 = vmatpush1.msra.mxu0 0.0
        %518 = vmatprep.subr.mxu0 0.0
        %519 = vmatpush1.msra.mxu0 0.0
        %520 = vmatprep.subr.mxu0 0.0
        %521 = vmatpush1.msra.mxu0 0.0
        %522 = vmatprep.subr.mxu0 0.0
        %523 = vmatpush1.msra.mxu0 0.0
        %524 = vmatprep.subr.mxu0 0.0
        %525 = vmatpush1.msra.mxu0 0.0
        %526 = vmatprep.subr.mxu0 0.0
        %527 = vmatpush1.msra.mxu0 0.0
        %528 = vmatprep.subr.mxu0 0.0
        %529 = vmatpush1.msra.mxu0 0.0
        %530 = vmatprep.subr.mxu0 0.0
        %531 = vmatpush1.msra.mxu0 0.0
        %532 = vmatprep.subr.mxu0 0.0
        %533 = vmatpush1.msra.mxu0 0.0
        %534 = vmatprep.subr.mxu0 0.0
        %535 = vmatpush1.msra.mxu0 0.0
        %536 = vmatprep.subr.mxu0 0.0
        %537 = vmatpush1.msra.mxu0 0.0
        %538 = vmatprep.subr.mxu0 0.0
        %539 = vmatpush1.msra.mxu0 0.0
        %540 = vmatprep.subr.mxu0 0.0
        %541 = vmatpush1.msra.mxu0 0.0
        %542 = vmatprep.subr.mxu0 0.0
        %543 = vmatpush1.msra.mxu0 0.0
        %544 = vmatprep.subr.mxu0 0.0
        %545 = vmatpush1.msra.mxu0 0.0
        %546 = vmatprep.subr.mxu0 0.0
        %547 = vmatpush1.msra.mxu0 0.0
        %548 = vmatprep.subr.mxu0 0.0
        %549 = vmatpush1.msra.mxu0 0.0
        %550 = vmatprep.subr.mxu0 0.0
        %551 = vmatpush1.msra.mxu0 0.0
        %552 = vmatprep.subr.mxu0 0.0
        %553 = vmatpush1.msra.mxu0 0.0
        %554 = vmatprep.subr.mxu0 0.0
        %555 = vmatpush1.msra.mxu0 0.0
        %556 = vmatprep.subr.mxu0 0.0
        %557 = vmatpush1.msra.mxu0 0.0
        %558 = vmatprep.subr.mxu0 0.0
        %559 = vmatpush1.msra.mxu0 0.0
        %560 = vmatprep.subr.mxu0 0.0
        %561 = vmatpush1.msra.mxu0 0.0
        %562 = vmatprep.subr.mxu0 0.0
        %563 = vmatpush1.msra.mxu0 0.0
        %564 = vmatprep.subr.mxu0 0.0
        %565 = vmatpush1.msra.mxu0 0.0
        %566 = vmatprep.subr.mxu0 0.0
        %567 = vmatpush1.msra.mxu0 0.0
        %568 = vmatprep.subr.mxu0 0.0
        %569 = vmatpush1.msra.mxu0 0.0
        %570 = vmatprep.subr.mxu0 0.0
        %571 = vmatpush1.msra.mxu0 0.0
        %572 = vmatprep.mubr.f32.mxu0 0.0
        %573 = vmatmul.mubr.f32.gmra.mrb[0].mxu0 %v503
        %v574 = vpop.f32.mrb[0].mxu0
        %v575 = vadd.f32 %v496, %v574
        %v576 = vpop.f32.mrb[0].mxu0
        %577 = vmatprep.mubr.f32.mxu0 0.0
        %578 = vmatmul.mubr.f32.gmra.mrb[0].mxu0 %v506
        %v579 = vpop.f32.mrb[0].mxu0
        %v580 = vadd.f32 %v500, %v579
        %v581 = vpop.f32.mrb[0].mxu0
        %582 = vdwg.mxu0
        %583 = vst [vmem:[%s202] sm:$0xff] %v575
        %584 = vst [vmem:[%s202 + $0x8] sm:$0xff] %v580
        %s585 = sand.u32 %s97, 1
        %s586 = scalar_lea.sflag [#allocation4], %s585
        %s587 = sand.u32 %s97, 1
        %s588 = smul.addr %s587, 16
        %s589 = scalar_lea.vmem [#allocation7], %s588
        // Predicated region
        $region41: #{tpu_custom_call.1} parent=31 // pred_check
          %p590 = pneg %p107
        $region42: #{tpu_custom_call.1} parent=31 // pred_check_branch
          %592 = sbr.rel (%p590) target = $region44
        $region43: #{tpu_custom_call.1} parent=31 // pred_region
          %s594 = ssub.s32 256, 256
          %595 = vsyncadd %s586, %s594
          %s596 = smul.addr %s21, 128
          %s597 = scalar_lea.hbm %s3, %s596
          %s598 = sshll.u32 %s589, 4
          %s599 = int_to_ptr.vmem [resolvable:$true] %s598
          %604 = dma.vmem_to_hbm [thread:$0]  %s599, 256, %s597, %s586, 128, 256, 8
        $region44: #{tpu_custom_call.1} parent=31 // pred_fallthru
          _
      $region32: #{tpu_custom_call.1} parent=5 // pred_fallthru
        _
      %p605 = scmp.le.s32.totalorder 2, %s16
      // Predicated region
      $region45: #{tpu_custom_call.1} parent=5 // pred_check
        %p606 = pneg %p605
      $region46: #{tpu_custom_call.1} parent=5 // pred_check_branch
        %608 = sbr.rel (%p606) target = $region48
      $region47: #{tpu_custom_call.1} parent=5 // pred_region
        %s609 = ssub.s32 %s16, 2
        // Predicated region
        $region49: #{tpu_custom_call.1} parent=47 // pred_check
          %p610 = pneg %p113
        $region50: #{tpu_custom_call.1} parent=47 // pred_check_branch
          %612 = sbr.rel (%p610) target = $region52
        $region51: #{tpu_custom_call.1} parent=47 // pred_region
          %s613 = sand.u32 %s98, 1
          %s614 = scalar_lea.sflag [#allocation4], %s613
          %s615 = sand.u32 %s98, 1
          %s616 = smul.addr %s615, 16
          %s617 = scalar_lea.vmem [#allocation7], %s616
          %618 = dma.done %s614, 256
        $region52: #{tpu_custom_call.1} parent=47 // pred_fallthru
          _
      $region48: #{tpu_custom_call.1} parent=5 // pred_fallthru
        _
    $region6: #{tpu_custom_call.1} parent=1 // loop_footer
      %s20 = sadd.s32 1, %s16
    $region7: #{tpu_custom_call.1} parent=1 // loop_footer_branch
      %15 = sbr.rel target = $region3
    $region8: #{tpu_custom_call.1} parent=1 // loop_exit
      _
    %619 = vsyncpa [#allocation3], 1
    %s620 = scalar_lea.sflag [#allocation3], 1
    %621 = vsyncpa %s620, 1
    %622 = vsyncpa [#allocation6], 1
    %623 = vsyncpa [#allocation4], 1
    %s624 = scalar_lea.sflag [#allocation4], 1
    %625 = vsyncpa %s624, 1

</llo_original>
